<compile_context>
chip_gen: v6e
topology: v6e:2x2x1
jax: 0.10.0
libtpu: 0.0.40
codegen_flags: <defaults>
</compile_context>

<pallas_src>
import math
import functools

import jax
import jax.numpy as jnp
from jax import lax
from jax.experimental import pallas as pl
from jax.experimental.pallas import tpu as pltpu


def _mxu_supports_int8():
    """int8 x int8 -> int32 MXU is native on v5e/v6e; v7x / unknown chips -> bf16 path."""
    try:
        kind = jax.devices()[0].device_kind.lower()
    except Exception:
        return False
    return ("v5" in kind) or ("v6" in kind)


def _round_away_from_zero(x):
    # CUDA invoke_quant rounds half away from zero (jnp.round is half-to-even).
    return jnp.sign(x) * jnp.floor(jnp.abs(x) + 0.5)


# ---------------- Kernel A: W8A8OF16 linear with dynamic per-token input scale ------
def _quant_linear_int8_kernel(x_ref, xs_ref, w_ref, ws_ref, b_ref, o_ref):
    # x: (tm, K) int8, w: (K, tn) int8 -> int32 accumulate on the MXU (no f32 upcast).
    acc = lax.dot_general(x_ref[...], w_ref[...],
                          dimension_numbers=(((1,), (0,)), ((), ())),
                          preferred_element_type=jnp.int32).astype(jnp.float32)
    o_ref[...] = (acc * xs_ref[...] * ws_ref[...] + b_ref[...]).astype(o_ref.dtype)


def _quant_linear_bf16_kernel(x_ref, xs_ref, w_ref, ws_ref, b_ref, o_ref):
    # bf16 MXU path (exact for int8-valued operands); weight pre-cast in the wrapper.
    x = x_ref[...].astype(jnp.bfloat16)
    acc = lax.dot_general(x, w_ref[...],
                          dimension_numbers=(((1,), (0,)), ((), ())),
                          preferred_element_type=jnp.float32)
    o_ref[...] = (acc * xs_ref[...] * ws_ref[...] + b_ref[...]).astype(o_ref.dtype)


def quant_linear(x_i8, x_scale, w_t_i8, w_scale, bias, *, tm=256, tn=512,
                 out_dtype=jnp.bfloat16, use_int8=None):
    """y = (x_i8 @ W.T) * x_scale[:,None] * w_scale[None,:] + bias, in bf16.

    x_i8:    (M, K) int8          x_scale: (M,)  f32 per-token scale
    w_t_i8:  (K, N) int8 (= W.T, pre-transposed outside the forward pass)
    w_scale: (N,)   f32 per-channel scale     bias: (N,) f32
    """
    M, K = x_i8.shape
    N = w_t_i8.shape[1]
    if use_int8 is None:
        use_int8 = _mxu_supports_int8()

    tm = min(tm, M)
    tn = min(tn, N)

    xs = x_scale.reshape(M, 1).astype(jnp.float32)
    ws = w_scale.reshape(1, N).astype(jnp.float32)
    b = bias.reshape(1, N).astype(jnp.float32)

    if use_int8:
        kernel = _quant_linear_int8_kernel
        w_in = w_t_i8
        w_bytes = K * N
    else:
        kernel = _quant_linear_bf16_kernel
        w_in = w_t_i8.astype(jnp.bfloat16)   # cast once, not per grid step
        w_bytes = 2 * K * N

    # n outer / m inner: the (K, tn) weight tile stays resident across the m loop.
    grid = (pl.cdiv(N, tn), pl.cdiv(M, tm))
    return pl.pallas_call(
        kernel,
        out_shape=jax.ShapeDtypeStruct((M, N), out_dtype),
        grid_spec=pltpu.PrefetchScalarGridSpec(
            num_scalar_prefetch=0,
            grid=grid,
            in_specs=[
                pl.BlockSpec((tm, K), lambda j, i: (i, 0)),
                pl.BlockSpec((tm, 1), lambda j, i: (i, 0)),
                pl.BlockSpec((K, tn), lambda j, i: (0, j)),
                pl.BlockSpec((1, tn), lambda j, i: (0, j)),
                pl.BlockSpec((1, tn), lambda j, i: (0, j)),
            ],
            out_specs=pl.BlockSpec((tm, tn), lambda j, i: (i, j)),
        ),
        compiler_params=pltpu.CompilerParams(
            dimension_semantics=("parallel", "parallel"),
            vmem_limit_bytes=32 * 1024 * 1024),
        cost_estimate=pl.CostEstimate(
            flops=2 * M * K * N, transcendentals=0,
            bytes_accessed=M * K + w_bytes + 2 * M * N + 4 * (M + 2 * N)),
    )(x_i8, xs, w_in, ws, b)


# ---------------- Kernel B: non-causal attention straight off the packed qkv --------
def _attn_kernel(qkv_ref, o_ref, *, num_heads, head_dim, embed_dim, scale):
    # qkv_ref: (S, 3E) bf16 for one batch element; o_ref: (S, E) bf16.
    # TODO(synk): for long sequences (v7x 64 MiB VMEM) switch to a KV-tiled
    # online-softmax; SigLIP's fixed S (<=1024) fits comfortably with full softmax.
    outs = []
    for h in range(num_heads):
        lo = h * head_dim
        hi = lo + head_dim
        q = qkv_ref[:, lo:hi]                                         # (S, D) bf16
        k = qkv_ref[:, embed_dim + lo:embed_dim + hi]                 # (S, D) bf16
        v = qkv_ref[:, 2 * embed_dim + lo:2 * embed_dim + hi]         # (S, D) bf16
        # 'NT' contraction over head_dim -- no explicit k.T relayout through the XLU.
        s = lax.dot_general(q, k, dimension_numbers=(((1,), (1,)), ((), ())),
                            preferred_element_type=jnp.float32) * scale
        m = jnp.max(s, axis=-1, keepdims=True)
        p = jnp.exp(s - m)
        l = jnp.sum(p, axis=-1, keepdims=True)
        acc = lax.dot_general(p.astype(qkv_ref.dtype), v,
                              dimension_numbers=(((1,), (0,)), ((), ())),
                              preferred_element_type=jnp.float32)
        outs.append((acc * pl.reciprocal(l, approx=False)).astype(o_ref.dtype))
    # One lane-dense (S, E) store (E is a multiple of 128 for real SigLIP) instead of
    # per-head masked stores + an XLA transpose/reshape afterwards.
    o_ref[...] = jnp.concatenate(outs, axis=-1)


def fused_attention(qkv, *, bsz, seqlen, num_heads, head_dim):
    """flash_attn_func(q, k, v, softmax_scale=None, causal=False) equivalent that reads
    the packed (M, 3E) qkv_proj activation buffer directly and writes (M, E)."""
    embed_dim = num_heads * head_dim
    three_e = 3 * embed_dim
    qkv3 = qkv.reshape(bsz, seqlen, three_e)     # free reshape (leading-dim split)
    kernel = functools.partial(_attn_kernel, num_heads=num_heads, head_dim=head_dim,
                               embed_dim=embed_dim, scale=1.0 / math.sqrt(head_dim))
    out = pl.pallas_call(
        kernel,
        out_shape=jax.ShapeDtypeStruct((bsz, seqlen, embed_dim), jnp.bfloat16),
        grid_spec=pltpu.PrefetchScalarGridSpec(
            num_scalar_prefetch=0,
            grid=(bsz,),
            in_specs=[pl.BlockSpec((None, seqlen, three_e), lambda bi: (bi, 0, 0))],
            out_specs=pl.BlockSpec((None, seqlen, embed_dim), lambda bi: (bi, 0, 0)),
        ),
        compiler_params=pltpu.CompilerParams(
            dimension_semantics=("parallel",),
            vmem_limit_bytes=32 * 1024 * 1024),
        cost_estimate=pl.CostEstimate(
            flops=4 * bsz * num_heads * seqlen * seqlen * head_dim,
            transcendentals=bsz * num_heads * seqlen * seqlen,
            bytes_accessed=2 * bsz * seqlen * (three_e + embed_dim)),
    )(qkv3)
    return out.reshape(bsz * seqlen, embed_dim)  # free reshape, already lane-dense


# ---------------- Kernel C: fused invoke_quant (per-token int8) + out_proj ----------
def _quant_out_proj_int8_kernel(a_ref, w_ref, ws_ref, b_ref, o_ref):
    a = a_ref[...].astype(jnp.float32)                                # (tm, E)
    absmax = jnp.max(jnp.abs(a), axis=-1, keepdims=True)
    scale = absmax * (1.0 / 127.0)                                    # per-token scale
    safe = jnp.where(scale > 0.0, scale, 1.0)
    q = jnp.clip(_round_away_from_zero(a / safe), -127.0, 127.0)
    q_i8 = q.astype(jnp.int32).astype(jnp.int8)                       # exact (int-valued)
    acc = lax.dot_general(q_i8, w_ref[...],
                          dimension_numbers=(((1,), (0,)), ((), ())),
                          preferred_element_type=jnp.int32).astype(jnp.float32)
    o_ref[...] = (acc * scale * ws_ref[...] + b_ref[...]).astype(o_ref.dtype)


def _quant_out_proj_bf16_kernel(a_ref, w_ref, ws_ref, b_ref, o_ref):
    a = a_ref[...].astype(jnp.float32)
    absmax = jnp.max(jnp.abs(a), axis=-1, keepdims=True)
    scale = absmax * (1.0 / 127.0)
    safe = jnp.where(scale > 0.0, scale, 1.0)
    q = jnp.clip(_round_away_from_zero(a / safe), -127.0, 127.0)
    acc = lax.dot_general(q.astype(jnp.bfloat16), w_ref[...],          # exact int values
                          dimension_numbers=(((1,), (0,)), ((), ())),
                          preferred_element_type=jnp.float32)
    o_ref[...] = (acc * scale * ws_ref[...] + b_ref[...]).astype(o_ref.dtype)


def quant_out_proj(attn, w_t_i8, w_scale, bias, *, tm=256, tn=512,
                   out_dtype=jnp.bfloat16, use_int8=None):
    """Per-token dynamic int8 quantization of `attn` fused with the W8A8OF16 out_proj.
    Note: the cheap quant step is recomputed per N-tile (K = E stays whole)."""
    M, E = attn.shape
    N = w_t_i8.shape[1]
    if use_int8 is None:
        use_int8 = _mxu_supports_int8()

    tm = min(tm, M)
    tn = min(tn, N)

    ws = w_scale.reshape(1, N).astype(jnp.float32)
    b = bias.reshape(1, N).astype(jnp.float32)

    if use_int8:
        kernel = _quant_out_proj_int8_kernel
        w_in = w_t_i8
        w_bytes = E * N
    else:
        kernel = _quant_out_proj_bf16_kernel
        w_in = w_t_i8.astype(jnp.bfloat16)
        w_bytes = 2 * E * N

    grid = (pl.cdiv(N, tn), pl.cdiv(M, tm))
    return pl.pallas_call(
        kernel,
        out_shape=jax.ShapeDtypeStruct((M, N), out_dtype),
        grid_spec=pltpu.PrefetchScalarGridSpec(
            num_scalar_prefetch=0,
            grid=grid,
            in_specs=[
                pl.BlockSpec((tm, E), lambda j, i: (i, 0)),
                pl.BlockSpec((E, tn), lambda j, i: (0, j)),
                pl.BlockSpec((1, tn), lambda j, i: (0, j)),
                pl.BlockSpec((1, tn), lambda j, i: (0, j)),
            ],
            out_specs=pl.BlockSpec((tm, tn), lambda j, i: (i, j)),
        ),
        compiler_params=pltpu.CompilerParams(
            dimension_semantics=("parallel", "parallel"),
            vmem_limit_bytes=32 * 1024 * 1024),
        cost_estimate=pl.CostEstimate(
            flops=2 * M * E * N, transcendentals=0,
            bytes_accessed=2 * M * E + w_bytes + 2 * M * N + 8 * N),
    )(attn, w_in, ws, b)


# ---------------- Module forward -----------------------------------------------------
def quant_siglip_flash_attention_forward(
        x_i8, x_scale, w_qkv_t, ws_qkv, b_qkv, w_out_t, ws_out, b_out,
        *, bsz, seqlen, num_heads):
    M, E = x_i8.shape
    head_dim = E // num_heads
    use_int8 = _mxu_supports_int8()

    # 1) qkv_proj (W8A8OF16, per-token dynamic input scale) -> (M, 3E) bf16
    qkv = quant_linear(x_i8, x_scale, w_qkv_t, ws_qkv, b_qkv, use_int8=use_int8)
    # 2) non-causal attention directly on the packed qkv buffer -> (M, E) bf16
    attn = fused_attention(qkv, bsz=bsz, seqlen=seqlen,
                           num_heads=num_heads, head_dim=head_dim)
    # 3)+4) fused invoke_quant + out_proj -> (M, E) bf16
    out = quant_out_proj(attn, w_out_t, ws_out, b_out, use_int8=use_int8)
    # Final cast mirrors the fp16 `in_out_fc2_act_buffer` of the CUDA module.
    return out.astype(jnp.float16)


if __name__ == "__main__":
    bsz, seqlen = 2, 64
    embed_dim, num_heads = 128, 4
    M = bsz * seqlen

    key = jax.random.PRNGKey(0)
    k1, k2, k3, k4, k5, k6, k7 = jax.random.split(key, 7)

    # deterministic quantized parameters (int8 weights, per-channel scales, bias)
    w_qkv = jax.random.randint(k1, (3 * embed_dim, embed_dim), -127, 128,
                               dtype=jnp.int32).astype(jnp.int8)
    ws_qkv = (jax.random.uniform(k2, (3 * embed_dim,)) * 0.02 + 0.005).astype(jnp.float32)
    b_qkv = (jax.random.normal(k3, (3 * embed_dim,)) * 0.02).astype(jnp.float32)

    w_out = jax.random.randint(k4, (embed_dim, embed_dim), -127, 128,
                               dtype=jnp.int32).astype(jnp.int8)
    ws_out = (jax.random.uniform(k5, (embed_dim,)) * 0.02 + 0.005).astype(jnp.float32)
    b_out = (jax.random.normal(k6, (embed_dim,)) * 0.02).astype(jnp.float32)

    # Weights stored pre-transposed as (K, N): hoisted out of the forward pass.
    w_qkv_t = jnp.transpose(w_qkv)
    w_out_t = jnp.transpose(w_out)

    # input: pre-quantized hidden states + per-token dynamic scales
    # (buffer.quantized_hidden_states_buffer / buffer.quantized_scale_buffer)
    hidden = jax.random.normal(k7, (M, embed_dim), dtype=jnp.float32)
    absmax = jnp.max(jnp.abs(hidden), axis=-1, keepdims=True)
    x_scale = (absmax / 127.0).reshape(M)
    x_i8 = jnp.clip(jnp.round(hidden / absmax * 127.0), -127, 127).astype(jnp.int8)

    out = quant_siglip_flash_attention_forward(
        x_i8, x_scale, w_qkv_t, ws_qkv, b_qkv, w_out_t, ws_out, b_out,
        bsz=bsz, seqlen=seqlen, num_heads=num_heads)
    jax.block_until_ready(out)
    assert out.shape == (M, embed_dim) and out.dtype == jnp.float16
    assert bool(jnp.all(jnp.isfinite(out.astype(jnp.float32))))
    print("KERNEL_OK")
</pallas_src>

<mosaic_0001>
module attributes {stable_mosaic.version = 11 : i64} {
  func.func @_quant_linear_bf16_kernel(%arg0: i32, %arg1: i32, %arg2: memref<128x128xi8, #tpu.memory_space<vmem>>, %arg3: memref<128x1xf32, #tpu.memory_space<vmem>>, %arg4: memref<128x384xbf16, #tpu.memory_space<vmem>>, %arg5: memref<1x384xf32, #tpu.memory_space<vmem>>, %arg6: memref<1x384xf32, #tpu.memory_space<vmem>>, %arg7: memref<128x384xbf16, #tpu.memory_space<vmem>>) attributes {dimension_semantics = [#tpu.dimension_semantics<parallel>, #tpu.dimension_semantics<parallel>], iteration_bounds = array<i64: 1, 1>, scalar_prefetch = 0 : i64, scratch_operands = 0 : i64, tpu.core_type = #tpu.core_type<tc>, window_params = [{transform_indices = @transform_0, window_bounds = array<i64: 128, 128>}, {transform_indices = @transform_1, window_bounds = array<i64: 128, 1>}, {transform_indices = @transform_2, window_bounds = array<i64: 128, 384>}, {transform_indices = @transform_3, window_bounds = array<i64: 1, 384>}, {transform_indices = @transform_4, window_bounds = array<i64: 1, 384>}, {transform_indices = @transform_5, window_bounds = array<i64: 128, 384>}]} {
    %c0 = arith.constant 0 : index
    %c0_0 = arith.constant 0 : index
    %0 = vector.load %arg2[%c0, %c0_0] : memref<128x128xi8, #tpu.memory_space<vmem>>, vector<128x128xi8>
    %1 = arith.sitofp %0 : vector<128x128xi8> to vector<128x128xbf16>
    %c0_1 = arith.constant 0 : index
    %c0_2 = arith.constant 0 : index
    %2 = vector.load %arg4[%c0_1, %c0_2] : memref<128x384xbf16, #tpu.memory_space<vmem>>, vector<128x384xbf16>
    %cst = arith.constant dense<0.000000e+00> : vector<128x384xf32>
    %3 = tpu.matmul %1, %2, %cst {dimension_numbers = #tpu.dot_dimension_numbers<[1], [0], [0], [1], [0, 0, 1, 1], [], []>} : vector<128x128xbf16>, vector<128x384xbf16>, vector<128x384xf32> -> vector<128x384xf32>
    %c0_3 = arith.constant 0 : index
    %c0_4 = arith.constant 0 : index
    %4 = vector.load %arg3[%c0_3, %c0_4] : memref<128x1xf32, #tpu.memory_space<vmem>>, vector<128x1xf32>
    %5 = vector.broadcast %4 : vector<128x1xf32> to vector<128x384xf32>
    %6 = arith.mulf %3, %5 : vector<128x384xf32>
    %c0_5 = arith.constant 0 : index
    %c0_6 = arith.constant 0 : index
    %7 = vector.load %arg5[%c0_5, %c0_6] : memref<1x384xf32, #tpu.memory_space<vmem>>, vector<1x384xf32>
    %8 = vector.broadcast %7 : vector<1x384xf32> to vector<128x384xf32>
    %9 = arith.mulf %6, %8 : vector<128x384xf32>
    %c0_7 = arith.constant 0 : index
    %c0_8 = arith.constant 0 : index
    %10 = vector.load %arg6[%c0_7, %c0_8] : memref<1x384xf32, #tpu.memory_space<vmem>>, vector<1x384xf32>
    %11 = vector.broadcast %10 : vector<1x384xf32> to vector<128x384xf32>
    %12 = arith.addf %9, %11 : vector<128x384xf32>
    %13 = arith.truncf %12 : vector<128x384xf32> to vector<128x384xbf16>
    %c0_9 = arith.constant 0 : index
    %c0_10 = arith.constant 0 : index
    %14 = vector.load %arg7[%c0_9, %c0_10] : memref<128x384xbf16, #tpu.memory_space<vmem>>, vector<128x384xbf16>
    tpu.vector_store %arg7[%c0_9, %c0_10], %13 {strides = array<i32>} : memref<128x384xbf16, #tpu.memory_space<vmem>>, vector<128x384xbf16>,
    return
  }
  func.func @transform_0(%arg0: i32, %arg1: i32) -> (i32, i32) {
    %c0_i32 = arith.constant 0 : i32
    %c0_i32_0 = arith.constant 0 : i32
    return %arg1, %c0_i32 : i32, i32
  }
  func.func @transform_1(%arg0: i32, %arg1: i32) -> (i32, i32) {
    %c0_i32 = arith.constant 0 : i32
    %c0_i32_0 = arith.constant 0 : i32
    return %arg1, %c0_i32 : i32, i32
  }
  func.func @transform_2(%arg0: i32, %arg1: i32) -> (i32, i32) {
    %c0_i32 = arith.constant 0 : i32
    %c0_i32_0 = arith.constant 0 : i32
    return %c0_i32, %arg0 : i32, i32
  }
  func.func @transform_3(%arg0: i32, %arg1: i32) -> (i32, i32) {
    %c0_i32 = arith.constant 0 : i32
    %c0_i32_0 = arith.constant 0 : i32
    return %c0_i32, %arg0 : i32, i32
  }
  func.func @transform_4(%arg0: i32, %arg1: i32) -> (i32, i32) {
    %c0_i32 = arith.constant 0 : i32
    %c0_i32_0 = arith.constant 0 : i32
    return %c0_i32, %arg0 : i32, i32
  }
  func.func @transform_5(%arg0: i32, %arg1: i32) -> (i32, i32) {
    %c0_i32 = arith.constant 0 : i32
    return %arg1, %arg0 : i32, i32
  }
}

</mosaic_0001>

<llo_original>
// kernel: tpu_custom_call.1
$region0: #{tpu_custom_call.1}
  #allocation0 [shape = 'u32[]', space=smem, size = 0x4, offset = 0x4, fixed_abs, tag = 'smem constant byte address 0x4 - core index']
  #allocation1 [shape = 'u32[144,128]{1,0:T(1,128)}', space=vmem, size = 0x12000, scoped, tag = 'internal scratch']
  %s0 = inlined_call_operand.vmem [shape: s8[128,128], index: 0, kind: input, shape index: {}]
  %s1 = inlined_call_operand.vmem [shape: f32[128,1], index: 1, kind: input, shape index: {}]
  %s2 = inlined_call_operand.hbm [shape: bf16[128,384], index: 2, kind: input, shape index: {}]
  %s3 = inlined_call_operand.vmem [shape: f32[1,384], index: 3, kind: input, shape index: {}]
  %s4 = inlined_call_operand.vmem [shape: f32[1,384], index: 4, kind: input, shape index: {}]
  %s5 = inlined_call_operand.hbm [shape: bf16[128,384], index: 5, kind: output, shape index: {}]
  %s6 = sld [smem:[#allocation0]]
  $region34: #{tpu_custom_call.1} parent=0
    _
  %s8 = ssub.s32 1, %s6
  %s9 = scalar_select 0, %s8, %s6
  $region1: #{tpu_custom_call.1} parent=0
    #allocation2 [shape = 'u8[98304]{0}', space=vmem, size = 0x18000, scoped, tag = 'input window, operand 2, single buffered']
    #allocation3 [shape = 's32[1]{0}', space=sflag, size = 0x4, scoped, tag = 'scoped memory for tpu_custom_call.1']
    #allocation4 [shape = 's32[1]{0}', space=sflag, size = 0x4, scoped, tag = 'scoped memory for tpu_custom_call.1']
    #allocation5 [shape = 'u8[98304]{0}', space=vmem, size = 0x18000, scoped, tag = 'output window, operand 0, single buffered']
    %10 = vsyncpa [#allocation3], 0
    %11 = vsyncpa [#allocation4], 0
    // Predicated region
    $region2: #{tpu_custom_call.1} parent=1 // pred_check
      _
    $region3: #{tpu_custom_call.1} parent=1 // pred_check_branch
      %13 = sbr.rel (0) target = $region5
    $region4: #{tpu_custom_call.1} parent=1 // pred_region
      _
    $region5: #{tpu_custom_call.1} parent=1 // pred_fallthru
      _
    // Predicated region
    $region6: #{tpu_custom_call.1} parent=1 // pred_check
      _
    $region7: #{tpu_custom_call.1} parent=1 // pred_check_branch
      %15 = sbr.rel (0) target = $region9
    $region8: #{tpu_custom_call.1} parent=1 // pred_region
      _
    $region9: #{tpu_custom_call.1} parent=1 // pred_fallthru
      _
    // Predicated region
    $region10: #{tpu_custom_call.1} parent=1 // pred_check
      _
    $region11: #{tpu_custom_call.1} parent=1 // pred_check_branch
      %17 = sbr.rel (0) target = $region13
    $region12: #{tpu_custom_call.1} parent=1 // pred_region
      %s19 = ssub.s32 3072, 3072
      %20 = vsyncadd [#allocation3], %s19
      %s21 = sshll.u32 [#allocation2], 4
      %s22 = int_to_ptr.vmem [resolvable:$true] %s21
      %27 = dma.hbm_to_vmem [thread:$0]  %s2, 3072, %s22, [#allocation3], 192, 192, 12
    $region13: #{tpu_custom_call.1} parent=1 // pred_fallthru
      _
    // Predicated region
    $region14: #{tpu_custom_call.1} parent=1 // pred_check
      _
    $region15: #{tpu_custom_call.1} parent=1 // pred_check_branch
      %29 = sbr.rel (0) target = $region17
    $region16: #{tpu_custom_call.1} parent=1 // pred_region
      _
    $region17: #{tpu_custom_call.1} parent=1 // pred_fallthru
      _
    // Predicated region
    $region18: #{tpu_custom_call.1} parent=1 // pred_check
      _
    $region19: #{tpu_custom_call.1} parent=1 // pred_check_branch
      %31 = sbr.rel (0) target = $region21
    $region20: #{tpu_custom_call.1} parent=1 // pred_region
      _
    $region21: #{tpu_custom_call.1} parent=1 // pred_fallthru
      _
    // Predicated region
    $region22: #{tpu_custom_call.1} parent=1 // pred_check
      _
    $region23: #{tpu_custom_call.1} parent=1 // pred_check_branch
      %33 = sbr.rel (0) target = $region25
    $region24: #{tpu_custom_call.1} parent=1 // pred_region
      %34 = dma.done [#allocation3], 3072
    $region25: #{tpu_custom_call.1} parent=1 // pred_fallthru
      _
    %v36 = vld [vmem:[%s0] sm:$0xff]
    %v37 = vld [vmem:[%s0 + $0x8] sm:$0xff]
    %v38 = vld [vmem:[%s0 + $0x10] sm:$0xff]
    %v39 = vld [vmem:[%s0 + $0x18] sm:$0xff]
    %v40 = vunpack.c.l.s8.bf16 %v36
    %v41 = vunpack.c.h.s8.bf16 %v36
    %v42 = vunpack.c.l.s8.bf16 %v37
    %v43 = vunpack.c.h.s8.bf16 %v37
    %v44 = vunpack.c.l.s8.bf16 %v38
    %v45 = vunpack.c.h.s8.bf16 %v38
    %v46 = vunpack.c.l.s8.bf16 %v39
    %v47 = vunpack.c.h.s8.bf16 %v39
    %v48 = vld [vmem:[#allocation2] sm:$0xff]
    %v49 = vld [vmem:[#allocation2 + $0x8] sm:$0xf]
    %v50 = vld [vmem:[#allocation2 + $0xc] sm:$0xff]
    %v51 = vld [vmem:[#allocation2 + $0x14] sm:$0xf]
    %v52 = vld [vmem:[#allocation2 + $0x18] sm:$0xff]
    %v53 = vld [vmem:[#allocation2 + $0x20] sm:$0xf]
    %v54 = vld [vmem:[#allocation2 + $0x24] sm:$0xff]
    %v55 = vld [vmem:[#allocation2 + $0x2c] sm:$0xf]
    %v56 = vld [vmem:[#allocation2 + $0x30] sm:$0xff]
    %v57 = vld [vmem:[#allocation2 + $0x38] sm:$0xf]
    %v58 = vld [vmem:[#allocation2 + $0x3c] sm:$0xff]
    %v59 = vld [vmem:[#allocation2 + $0x44] sm:$0xf]
    %v60 = vld [vmem:[#allocation2 + $0x48] sm:$0xff]
    %v61 = vld [vmem:[#allocation2 + $0x50] sm:$0xf]
    %v62 = vld [vmem:[#allocation2 + $0x54] sm:$0xff]
    %v63 = vld [vmem:[#allocation2 + $0x5c] sm:$0xf]
    %v64 = vld [vmem:[#allocation2 + $0x60] sm:$0xff]
    %v65 = vld [vmem:[#allocation2 + $0x68] sm:$0xf]
    %v66 = vld [vmem:[#allocation2 + $0x6c] sm:$0xff]
    %v67 = vld [vmem:[#allocation2 + $0x74] sm:$0xf]
    %v68 = vld [vmem:[#allocation2 + $0x78] sm:$0xff]
    %v69 = vld [vmem:[#allocation2 + $0x80] sm:$0xf]
    %v70 = vld [vmem:[#allocation2 + $0x84] sm:$0xff]
    %v71 = vld [vmem:[#allocation2 + $0x8c] sm:$0xf]
    %v72 = vld [vmem:[#allocation2 + $0x90] sm:$0xff]
    %v73 = vld [vmem:[#allocation2 + $0x98] sm:$0xf]
    %v74 = vld [vmem:[#allocation2 + $0x9c] sm:$0xff]
    %v75 = vld [vmem:[#allocation2 + $0xa4] sm:$0xf]
    %v76 = vld [vmem:[#allocation2 + $0xa8] sm:$0xff]
    %v77 = vld [vmem:[#allocation2 + $0xb0] sm:$0xf]
    %v78 = vld [vmem:[#allocation2 + $0xb4] sm:$0xff]
    %v79 = vld [vmem:[#allocation2 + $0xbc] sm:$0xf]
    %v112 = vunpack.c.l.b16 %v48
    %v113 = vunpack.c.h.b16 %v48
    %v114 = vunpack.c.l.b16 %v49
    %v115 = vunpack.c.l.b16 %v50
    %v116 = vunpack.c.h.b16 %v50
    %v117 = vunpack.c.l.b16 %v51
    %v118 = vunpack.c.l.b16 %v52
    %v119 = vunpack.c.h.b16 %v52
    %v120 = vunpack.c.l.b16 %v53
    %v121 = vunpack.c.l.b16 %v54
    %v122 = vunpack.c.h.b16 %v54
    %v123 = vunpack.c.l.b16 %v55
    %v124 = vunpack.c.l.b16 %v56
    %v125 = vunpack.c.h.b16 %v56
    %v126 = vunpack.c.l.b16 %v57
    %v127 = vunpack.c.l.b16 %v58
    %v128 = vunpack.c.h.b16 %v58
    %v129 = vunpack.c.l.b16 %v59
    %v130 = vunpack.c.l.b16 %v60
    %v131 = vunpack.c.h.b16 %v60
    %v132 = vunpack.c.l.b16 %v61
    %v133 = vunpack.c.l.b16 %v62
    %v134 = vunpack.c.h.b16 %v62
    %v135 = vunpack.c.l.b16 %v63
    %v136 = vunpack.c.l.b16 %v64
    %v137 = vunpack.c.h.b16 %v64
    %v138 = vunpack.c.l.b16 %v65
    %v139 = vunpack.c.l.b16 %v66
    %v140 = vunpack.c.h.b16 %v66
    %v141 = vunpack.c.l.b16 %v67
    %v142 = vunpack.c.l.b16 %v68
    %v143 = vunpack.c.h.b16 %v68
    %v144 = vunpack.c.l.b16 %v69
    %v145 = vunpack.c.l.b16 %v70
    %v146 = vunpack.c.h.b16 %v70
    %v147 = vunpack.c.l.b16 %v71
    %v148 = vunpack.c.l.b16 %v72
    %v149 = vunpack.c.h.b16 %v72
    %v150 = vunpack.c.l.b16 %v73
    %v151 = vunpack.c.l.b16 %v74
    %v152 = vunpack.c.h.b16 %v74
    %v153 = vunpack.c.l.b16 %v75
    %v154 = vunpack.c.l.b16 %v76
    %v155 = vunpack.c.h.b16 %v76
    %v156 = vunpack.c.l.b16 %v77
    %v157 = vunpack.c.l.b16 %v78
    %v158 = vunpack.c.h.b16 %v78
    %v159 = vunpack.c.l.b16 %v79
    %v160 = vpack.c.b16 %v115, %v112
    %v161 = vpack.c.b16 %v116, %v113
    %v162 = vpack.c.b16 %v117, %v114
    %v163 = vpack.c.b16 %v121, %v118
    %v164 = vpack.c.b16 %v122, %v119
    %v165 = vpack.c.b16 %v123, %v120
    %v166 = vpack.c.b16 %v127, %v124
    %v167 = vpack.c.b16 %v128, %v125
    %v168 = vpack.c.b16 %v129, %v126
    %v169 = vpack.c.b16 %v133, %v130
    %v170 = vpack.c.b16 %v134, %v131
    %v171 = vpack.c.b16 %v135, %v132
    %v172 = vpack.c.b16 %v139, %v136
    %v173 = vpack.c.b16 %v140, %v137
    %v174 = vpack.c.b16 %v141, %v138
    %v175 = vpack.c.b16 %v145, %v142
    %v176 = vpack.c.b16 %v146, %v143
    %v177 = vpack.c.b16 %v147, %v144
    %v178 = vpack.c.b16 %v151, %v148
    %v179 = vpack.c.b16 %v152, %v149
    %v180 = vpack.c.b16 %v153, %v150
    %v181 = vpack.c.b16 %v157, %v154
    %v182 = vpack.c.b16 %v158, %v155
    %v183 = vpack.c.b16 %v159, %v156
    %208 = vmatprep.subr.bf16.mxu0 %v182
    %209 = vmatpush1.bf16.msra.mxu0 %v181
    %210 = vmatprep.subr.bf16.mxu0 %v179
    %211 = vmatpush1.bf16.msra.mxu0 %v178
    %212 = vmatprep.subr.bf16.mxu0 %v176
    %213 = vmatpush1.bf16.msra.mxu0 %v175
    %214 = vmatprep.subr.bf16.mxu0 %v173
    %215 = vmatpush1.bf16.msra.mxu0 %v172
    %216 = vmatprep.subr.bf16.mxu0 %v170
    %217 = vmatpush1.bf16.msra.mxu0 %v169
    %218 = vmatprep.subr.bf16.mxu0 %v167
    %219 = vmatpush1.bf16.msra.mxu0 %v166
    %220 = vmatprep.subr.bf16.mxu0 %v164
    %221 = vmatpush1.bf16.msra.mxu0 %v163
    %222 = vmatprep.subr.bf16.mxu0 %v161
    %223 = vmatpush1.bf16.msra.mxu0 %v160
    %224 = vmatprep.subr.bf16.mxu0 0
    %225 = vmatpush2.bf16.msra.mxu0 0
    %226 = vmatprep.subr.bf16.mxu0 0
    %227 = vmatpush2.bf16.msra.mxu0 0
    %228 = vmatprep.subr.bf16.mxu0 0
    %229 = vmatpush2.bf16.msra.mxu0 0
    %230 = vmatprep.subr.bf16.mxu0 0
    %231 = vmatpush2.bf16.msra.mxu0 0
    %232 = vmatprep.subr.bf16.mxu0 0
    %233 = vmatpush2.bf16.msra.mxu0 0
    %234 = vmatprep.subr.bf16.mxu0 0
    %235 = vmatpush2.bf16.msra.mxu0 0
    %236 = vmatprep.subr.bf16.mxu0 0
    %237 = vmatpush2.bf16.msra.mxu0 0
    %238 = vmatprep.subr.bf16.mxu0 0
    %239 = vmatpush2.bf16.msra.mxu0 0
    %240 = vmatprep.mubr.bf16.mxu0 0
    %241 = vmatmul.mubr.bf16.gmra.mxu0 %v40
    %v242 = vpop.f32.mrf.mxu0
    %v243 = vadd.f32 0.0, %v242
    %v244 = vpop.f32.mrf.mxu0
    %v245 = vadd.f32 0.0, %v244
    %v246 = vpop.f32.mrf.mxu0
    %v247 = vadd.f32 0.0, %v246
    %v248 = vpop.f32.mrf.mxu0
    %v249 = vadd.f32 0.0, %v248
    %250 = vmatprep.mubr.bf16.mxu0 0
    %251 = vmatmul.mubr.bf16.gmra.mxu0 %v41
    %v252 = vpop.f32.mrf.mxu0
    %v253 = vadd.f32 0.0, %v252
    %v254 = vpop.f32.mrf.mxu0
    %v255 = vadd.f32 0.0, %v254
    %v256 = vpop.f32.mrf.mxu0
    %v257 = vadd.f32 0.0, %v256
    %v258 = vpop.f32.mrf.mxu0
    %v259 = vadd.f32 0.0, %v258
    %260 = vmatprep.mubr.bf16.mxu0 0
    %261 = vmatmul.mubr.bf16.gmra.mxu0 %v42
    %v262 = vpop.f32.mrf.mxu0
    %v263 = vadd.f32 0.0, %v262
    %v264 = vpop.f32.mrf.mxu0
    %v265 = vadd.f32 0.0, %v264
    %v266 = vpop.f32.mrf.mxu0
    %v267 = vadd.f32 0.0, %v266
    %v268 = vpop.f32.mrf.mxu0
    %v269 = vadd.f32 0.0, %v268
    %270 = vmatprep.mubr.bf16.mxu0 0
    %271 = vmatmul.mubr.bf16.gmra.mxu0 %v43
    %v272 = vpop.f32.mrf.mxu0
    %v273 = vadd.f32 0.0, %v272
    %v274 = vpop.f32.mrf.mxu0
    %v275 = vadd.f32 0.0, %v274
    %v276 = vpop.f32.mrf.mxu0
    %v277 = vadd.f32 0.0, %v276
    %v278 = vpop.f32.mrf.mxu0
    %v279 = vadd.f32 0.0, %v278
    %280 = vmatprep.mubr.bf16.mxu0 0
    %281 = vmatmul.mubr.bf16.gmra.mxu0 %v44
    %v282 = vpop.f32.mrf.mxu0
    %v283 = vadd.f32 0.0, %v282
    %v284 = vpop.f32.mrf.mxu0
    %v285 = vadd.f32 0.0, %v284
    %v286 = vpop.f32.mrf.mxu0
    %v287 = vadd.f32 0.0, %v286
    %v288 = vpop.f32.mrf.mxu0
    %v289 = vadd.f32 0.0, %v288
    %290 = vmatprep.mubr.bf16.mxu0 0
    %291 = vmatmul.mubr.bf16.gmra.mxu0 %v45
    %v292 = vpop.f32.mrf.mxu0
    %v293 = vadd.f32 0.0, %v292
    %v294 = vpop.f32.mrf.mxu0
    %v295 = vadd.f32 0.0, %v294
    %v296 = vpop.f32.mrf.mxu0
    %v297 = vadd.f32 0.0, %v296
    %v298 = vpop.f32.mrf.mxu0
    %v299 = vadd.f32 0.0, %v298
    %300 = vmatprep.mubr.bf16.mxu0 0
    %301 = vmatmul.mubr.bf16.gmra.mxu0 %v46
    %v302 = vpop.f32.mrf.mxu0
    %v303 = vadd.f32 0.0, %v302
    %v304 = vpop.f32.mrf.mxu0
    %v305 = vadd.f32 0.0, %v304
    %v306 = vpop.f32.mrf.mxu0
    %v307 = vadd.f32 0.0, %v306
    %v308 = vpop.f32.mrf.mxu0
    %v309 = vadd.f32 0.0, %v308
    %310 = vmatprep.mubr.bf16.mxu0 0
    %311 = vmatmul.mubr.bf16.gmra.mxu0 %v47
    %v312 = vpop.f32.mrf.mxu0
    %v313 = vadd.f32 0.0, %v312
    %v314 = vpop.f32.mrf.mxu0
    %v315 = vadd.f32 0.0, %v314
    %v316 = vpop.f32.mrf.mxu0
    %v317 = vadd.f32 0.0, %v316
    %v318 = vpop.f32.mrf.mxu0
    %v319 = vadd.f32 0.0, %v318
    %320 = vdwg.mxu0
    %321 = vmatprep.subr.bf16.mxu0 0
    %322 = vmatpush1.bf16.msra.mxu0 %v183
    %323 = vmatprep.subr.bf16.mxu0 0
    %324 = vmatpush1.bf16.msra.mxu0 %v180
    %325 = vmatprep.subr.bf16.mxu0 0
    %326 = vmatpush1.bf16.msra.mxu0 %v177
    %327 = vmatprep.subr.bf16.mxu0 0
    %328 = vmatpush1.bf16.msra.mxu0 %v174
    %329 = vmatprep.subr.bf16.mxu0 0
    %330 = vmatpush1.bf16.msra.mxu0 %v171
    %331 = vmatprep.subr.bf16.mxu0 0
    %332 = vmatpush1.bf16.msra.mxu0 %v168
    %333 = vmatprep.subr.bf16.mxu0 0
    %334 = vmatpush1.bf16.msra.mxu0 %v165
    %335 = vmatprep.subr.bf16.mxu0 0
    %336 = vmatpush1.bf16.msra.mxu0 %v162
    %337 = vmatprep.subr.bf16.mxu0 0
    %338 = vmatpush2.bf16.msra.mxu0 0
    %339 = vmatprep.subr.bf16.mxu0 0
    %340 = vmatpush2.bf16.msra.mxu0 0
    %341 = vmatprep.subr.bf16.mxu0 0
    %342 = vmatpush2.bf16.msra.mxu0 0
    %343 = vmatprep.subr.bf16.mxu0 0
    %344 = vmatpush2.bf16.msra.mxu0 0
    %345 = vmatprep.subr.bf16.mxu0 0
    %346 = vmatpush2.bf16.msra.mxu0 0
    %347 = vmatprep.subr.bf16.mxu0 0
    %348 = vmatpush2.bf16.msra.mxu0 0
    %349 = vmatprep.subr.bf16.mxu0 0
    %350 = vmatpush2.bf16.msra.mxu0 0
    %351 = vmatprep.subr.bf16.mxu0 0
    %352 = vmatpush2.bf16.msra.mxu0 0
    %353 = vmatprep.mubr.bf16.mxu0 0
    %354 = vmatmul.mubr.bf16.gmra.mxu0 %v40
    %v355 = vpop.f32.mrf.mxu0
    %v356 = vadd.f32 0.0, %v355
    %v357 = vpop.f32.mrf.mxu0
    %v358 = vpop.f32.mrf.mxu0
    %v359 = vadd.f32 0.0, %v358
    %v360 = vpop.f32.mrf.mxu0
    %361 = vmatprep.mubr.bf16.mxu0 0
    %362 = vmatmul.mubr.bf16.gmra.mxu0 %v41
    %v363 = vpop.f32.mrf.mxu0
    %v364 = vadd.f32 0.0, %v363
    %v365 = vpop.f32.mrf.mxu0
    %v366 = vpop.f32.mrf.mxu0
    %v367 = vadd.f32 0.0, %v366
    %v368 = vpop.f32.mrf.mxu0
    %369 = vmatprep.mubr.bf16.mxu0 0
    %370 = vmatmul.mubr.bf16.gmra.mxu0 %v42
    %v371 = vpop.f32.mrf.mxu0
    %v372 = vadd.f32 0.0, %v371
    %v373 = vpop.f32.mrf.mxu0
    %v374 = vpop.f32.mrf.mxu0
    %v375 = vadd.f32 0.0, %v374
    %v376 = vpop.f32.mrf.mxu0
    %377 = vmatprep.mubr.bf16.mxu0 0
    %378 = vmatmul.mubr.bf16.gmra.mxu0 %v43
    %v379 = vpop.f32.mrf.mxu0
    %v380 = vadd.f32 0.0, %v379
    %v381 = vpop.f32.mrf.mxu0
    %v382 = vpop.f32.mrf.mxu0
    %v383 = vadd.f32 0.0, %v382
    %v384 = vpop.f32.mrf.mxu0
    %385 = vmatprep.mubr.bf16.mxu0 0
    %386 = vmatmul.mubr.bf16.gmra.mxu0 %v44
    %v387 = vpop.f32.mrf.mxu0
    %v388 = vadd.f32 0.0, %v387
    %v389 = vpop.f32.mrf.mxu0
    %v390 = vpop.f32.mrf.mxu0
    %v391 = vadd.f32 0.0, %v390
    %v392 = vpop.f32.mrf.mxu0
    %393 = vmatprep.mubr.bf16.mxu0 0
    %394 = vmatmul.mubr.bf16.gmra.mxu0 %v45
    %v395 = vpop.f32.mrf.mxu0
    %v396 = vadd.f32 0.0, %v395
    %v397 = vpop.f32.mrf.mxu0
    %v398 = vpop.f32.mrf.mxu0
    %v399 = vadd.f32 0.0, %v398
    %v400 = vpop.f32.mrf.mxu0
    %401 = vmatprep.mubr.bf16.mxu0 0
    %402 = vmatmul.mubr.bf16.gmra.mxu0 %v46
    %v403 = vpop.f32.mrf.mxu0
    %v404 = vadd.f32 0.0, %v403
    %v405 = vpop.f32.mrf.mxu0
    %v406 = vpop.f32.mrf.mxu0
    %v407 = vadd.f32 0.0, %v406
    %v408 = vpop.f32.mrf.mxu0
    %409 = vmatprep.mubr.bf16.mxu0 0
    %410 = vmatmul.mubr.bf16.gmra.mxu0 %v47
    %v411 = vpop.f32.mrf.mxu0
    %v412 = vadd.f32 0.0, %v411
    %v413 = vpop.f32.mrf.mxu0
    %v414 = vpop.f32.mrf.mxu0
    %v415 = vadd.f32 0.0, %v414
    %v416 = vpop.f32.mrf.mxu0
    %417 = vdwg.mxu0
    %v418 = vld [vmem:[%s1] sm:$0xff]
    %v419 = vld [vmem:[%s1 + $0x8] sm:$0xff]
    %v420 = vld [vmem:[%s1 + $0x10] sm:$0xff]
    %v421 = vld [vmem:[%s1 + $0x18] sm:$0xff]
    %v422 = vld [vmem:[%s1 + $0x20] sm:$0xff]
    %v423 = vld [vmem:[%s1 + $0x28] sm:$0xff]
    %v424 = vld [vmem:[%s1 + $0x30] sm:$0xff]
    %v425 = vld [vmem:[%s1 + $0x38] sm:$0xff]
    %v426 = vld [vmem:[%s1 + $0x40] sm:$0xff]
    %v427 = vld [vmem:[%s1 + $0x48] sm:$0xff]
    %v428 = vld [vmem:[%s1 + $0x50] sm:$0xff]
    %v429 = vld [vmem:[%s1 + $0x58] sm:$0xff]
    %v430 = vld [vmem:[%s1 + $0x60] sm:$0xff]
    %v431 = vld [vmem:[%s1 + $0x68] sm:$0xff]
    %v432 = vld [vmem:[%s1 + $0x70] sm:$0xff]
    %v433 = vld [vmem:[%s1 + $0x78] sm:$0xff]
    %435 = vset.pattern.permute.xlu0 0
    %436 = vperm.xlu0 %435, %v418
    %v437 = vpop.permute.xlu0 %436
    %440 = vset.pattern.permute.xlu0 0
    %441 = vperm.xlu0 %440, %v419
    %v442 = vpop.permute.xlu0 %441
    %445 = vset.pattern.permute.xlu0 0
    %446 = vperm.xlu0 %445, %v420
    %v447 = vpop.permute.xlu0 %446
    %450 = vset.pattern.permute.xlu0 0
    %451 = vperm.xlu0 %450, %v421
    %v452 = vpop.permute.xlu0 %451
    %455 = vset.pattern.permute.xlu0 0
    %456 = vperm.xlu0 %455, %v422
    %v457 = vpop.permute.xlu0 %456
    %460 = vset.pattern.permute.xlu0 0
    %461 = vperm.xlu0 %460, %v423
    %v462 = vpop.permute.xlu0 %461
    %465 = vset.pattern.permute.xlu0 0
    %466 = vperm.xlu0 %465, %v424
    %v467 = vpop.permute.xlu0 %466
    %470 = vset.pattern.permute.xlu0 0
    %471 = vperm.xlu0 %470, %v425
    %v472 = vpop.permute.xlu0 %471
    %475 = vset.pattern.permute.xlu0 0
    %476 = vperm.xlu0 %475, %v426
    %v477 = vpop.permute.xlu0 %476
    %480 = vset.pattern.permute.xlu0 0
    %481 = vperm.xlu0 %480, %v427
    %v482 = vpop.permute.xlu0 %481
    %485 = vset.pattern.permute.xlu0 0
    %486 = vperm.xlu0 %485, %v428
    %v487 = vpop.permute.xlu0 %486
    %490 = vset.pattern.permute.xlu0 0
    %491 = vperm.xlu0 %490, %v429
    %v492 = vpop.permute.xlu0 %491
    %495 = vset.pattern.permute.xlu0 0
    %496 = vperm.xlu0 %495, %v430
    %v497 = vpop.permute.xlu0 %496
    %500 = vset.pattern.permute.xlu0 0
    %501 = vperm.xlu0 %500, %v431
    %v502 = vpop.permute.xlu0 %501
    %505 = vset.pattern.permute.xlu0 0
    %506 = vperm.xlu0 %505, %v432
    %v507 = vpop.permute.xlu0 %506
    %510 = vset.pattern.permute.xlu0 0
    %511 = vperm.xlu0 %510, %v433
    %v512 = vpop.permute.xlu0 %511
    %v514 = vmul.f32 %v243, %v437
    %v515 = vmul.f32 %v245, %v437
    %v516 = vmul.f32 %v356, %v437
    %v517 = vmul.f32 %v247, %v442
    %v518 = vmul.f32 %v249, %v442
    %v519 = vmul.f32 %v359, %v442
    %v520 = vmul.f32 %v253, %v447
    %v521 = vmul.f32 %v255, %v447
    %v522 = vmul.f32 %v364, %v447
    %v523 = vmul.f32 %v257, %v452
    %v524 = vmul.f32 %v259, %v452
    %v525 = vmul.f32 %v367, %v452
    %v526 = vmul.f32 %v263, %v457
    %v527 = vmul.f32 %v265, %v457
    %v528 = vmul.f32 %v372, %v457
    %v529 = vmul.f32 %v267, %v462
    %v530 = vmul.f32 %v269, %v462
    %v531 = vmul.f32 %v375, %v462
    %v532 = vmul.f32 %v273, %v467
    %v533 = vmul.f32 %v275, %v467
    %v534 = vmul.f32 %v380, %v467
    %v535 = vmul.f32 %v277, %v472
    %v536 = vmul.f32 %v279, %v472
    %v537 = vmul.f32 %v383, %v472
    %v538 = vmul.f32 %v283, %v477
    %v539 = vmul.f32 %v285, %v477
    %v540 = vmul.f32 %v388, %v477
    %v541 = vmul.f32 %v287, %v482
    %v542 = vmul.f32 %v289, %v482
    %v543 = vmul.f32 %v391, %v482
    %v544 = vmul.f32 %v293, %v487
    %v545 = vmul.f32 %v295, %v487
    %v546 = vmul.f32 %v396, %v487
    %v547 = vmul.f32 %v297, %v492
    %v548 = vmul.f32 %v299, %v492
    %v549 = vmul.f32 %v399, %v492
    %v550 = vmul.f32 %v303, %v497
    %v551 = vmul.f32 %v305, %v497
    %v552 = vmul.f32 %v404, %v497
    %v553 = vmul.f32 %v307, %v502
    %v554 = vmul.f32 %v309, %v502
    %v555 = vmul.f32 %v407, %v502
    %v556 = vmul.f32 %v313, %v507
    %v557 = vmul.f32 %v315, %v507
    %v558 = vmul.f32 %v412, %v507
    %v559 = vmul.f32 %v317, %v512
    %v560 = vmul.f32 %v319, %v512
    %v561 = vmul.f32 %v415, %v512
    %v562 = vld [vmem:[%s3] sm:$0x7]
    %v564 = vlaneseq
    %v565 = vshrl.u32 %v564, 7
    %v566 = vsub.s32 0, %v565
    %v567 = vrot.slane %v562, %v566
    %v568 = vlaneseq
    %v569 = vshrl.u32 %v568, 7
    %v570 = vsub.s32 1, %v569
    %v571 = vrot.slane %v562, %v570
    %v572 = vlaneseq
    %v573 = vshrl.u32 %v572, 7
    %v574 = vsub.s32 2, %v573
    %v575 = vrot.slane %v562, %v574
    %v579 = vmul.f32 %v514, %v567
    %v580 = vmul.f32 %v515, %v571
    %v581 = vmul.f32 %v516, %v575
    %v582 = vmul.f32 %v517, %v567
    %v583 = vmul.f32 %v518, %v571
    %v584 = vmul.f32 %v519, %v575
    %v585 = vmul.f32 %v520, %v567
    %v586 = vmul.f32 %v521, %v571
    %v587 = vmul.f32 %v522, %v575
    %v588 = vmul.f32 %v523, %v567
    %v589 = vmul.f32 %v524, %v571
    %v590 = vmul.f32 %v525, %v575
    %v591 = vmul.f32 %v526, %v567
    %v592 = vmul.f32 %v527, %v571
    %v593 = vmul.f32 %v528, %v575
    %v594 = vmul.f32 %v529, %v567
    %v595 = vmul.f32 %v530, %v571
    %v596 = vmul.f32 %v531, %v575
    %v597 = vmul.f32 %v532, %v567
    %v598 = vmul.f32 %v533, %v571
    %v599 = vmul.f32 %v534, %v575
    %v600 = vmul.f32 %v535, %v567
    %v601 = vmul.f32 %v536, %v571
    %v602 = vmul.f32 %v537, %v575
    %v603 = vmul.f32 %v538, %v567
    %v604 = vmul.f32 %v539, %v571
    %v605 = vmul.f32 %v540, %v575
    %v606 = vmul.f32 %v541, %v567
    %v607 = vmul.f32 %v542, %v571
    %v608 = vmul.f32 %v543, %v575
    %v609 = vmul.f32 %v544, %v567
    %v610 = vmul.f32 %v545, %v571
    %v611 = vmul.f32 %v546, %v575
    %v612 = vmul.f32 %v547, %v567
    %v613 = vmul.f32 %v548, %v571
    %v614 = vmul.f32 %v549, %v575
    %v615 = vmul.f32 %v550, %v567
    %v616 = vmul.f32 %v551, %v571
    %v617 = vmul.f32 %v552, %v575
    %v618 = vmul.f32 %v553, %v567
    %v619 = vmul.f32 %v554, %v571
    %v620 = vmul.f32 %v555, %v575
    %v621 = vmul.f32 %v556, %v567
    %v622 = vmul.f32 %v557, %v571
    %v623 = vmul.f32 %v558, %v575
    %v624 = vmul.f32 %v559, %v567
    %v625 = vmul.f32 %v560, %v571
    %v626 = vmul.f32 %v561, %v575
    %v627 = vld [vmem:[%s4] sm:$0x7]
    %v629 = vlaneseq
    %v630 = vshrl.u32 %v629, 7
    %v631 = vsub.s32 0, %v630
    %v632 = vrot.slane %v627, %v631
    %v633 = vlaneseq
    %v634 = vshrl.u32 %v633, 7
    %v635 = vsub.s32 1, %v634
    %v636 = vrot.slane %v627, %v635
    %v637 = vlaneseq
    %v638 = vshrl.u32 %v637, 7
    %v639 = vsub.s32 2, %v638
    %v640 = vrot.slane %v627, %v639
    %v644 = vadd.f32 %v579, %v632
    %v645 = vadd.f32 %v580, %v636
    %v646 = vadd.f32 %v581, %v640
    %v647 = vadd.f32 %v582, %v632
    %v648 = vadd.f32 %v583, %v636
    %v649 = vadd.f32 %v584, %v640
    %v650 = vadd.f32 %v585, %v632
    %v651 = vadd.f32 %v586, %v636
    %v652 = vadd.f32 %v587, %v640
    %v653 = vadd.f32 %v588, %v632
    %v654 = vadd.f32 %v589, %v636
    %v655 = vadd.f32 %v590, %v640
    %v656 = vadd.f32 %v591, %v632
    %v657 = vadd.f32 %v592, %v636
    %v658 = vadd.f32 %v593, %v640
    %v659 = vadd.f32 %v594, %v632
    %v660 = vadd.f32 %v595, %v636
    %v661 = vadd.f32 %v596, %v640
    %v662 = vadd.f32 %v597, %v632
    %v663 = vadd.f32 %v598, %v636
    %v664 = vadd.f32 %v599, %v640
    %v665 = vadd.f32 %v600, %v632
    %v666 = vadd.f32 %v601, %v636
    %v667 = vadd.f32 %v602, %v640
    %v668 = vadd.f32 %v603, %v632
    %v669 = vadd.f32 %v604, %v636
    %v670 = vadd.f32 %v605, %v640
    %v671 = vadd.f32 %v606, %v632
    %v672 = vadd.f32 %v607, %v636
    %v673 = vadd.f32 %v608, %v640
    %v674 = vadd.f32 %v609, %v632
    %v675 = vadd.f32 %v610, %v636
    %v676 = vadd.f32 %v611, %v640
    %v677 = vadd.f32 %v612, %v632
    %v678 = vadd.f32 %v613, %v636
    %v679 = vadd.f32 %v614, %v640
    %v680 = vadd.f32 %v615, %v632
    %v681 = vadd.f32 %v616, %v636
    %v682 = vadd.f32 %v617, %v640
    %v683 = vadd.f32 %v618, %v632
    %v684 = vadd.f32 %v619, %v636
    %v685 = vadd.f32 %v620, %v640
    %v686 = vadd.f32 %v621, %v632
    %v687 = vadd.f32 %v622, %v636
    %v688 = vadd.f32 %v623, %v640
    %v689 = vadd.f32 %v624, %v632
    %v690 = vadd.f32 %v625, %v636
    %v691 = vadd.f32 %v626, %v640
    %v692 = vpack.c.bf16 %v647, %v644
    %v693 = vpack.c.bf16 %v648, %v645
    %v694 = vpack.c.bf16 %v649, %v646
    %v695 = vpack.c.bf16 %v653, %v650
    %v696 = vpack.c.bf16 %v654, %v651
    %v697 = vpack.c.bf16 %v655, %v652
    %v698 = vpack.c.bf16 %v659, %v656
    %v699 = vpack.c.bf16 %v660, %v657
    %v700 = vpack.c.bf16 %v661, %v658
    %v701 = vpack.c.bf16 %v665, %v662
    %v702 = vpack.c.bf16 %v666, %v663
    %v703 = vpack.c.bf16 %v667, %v664
    %v704 = vpack.c.bf16 %v671, %v668
    %v705 = vpack.c.bf16 %v672, %v669
    %v706 = vpack.c.bf16 %v673, %v670
    %v707 = vpack.c.bf16 %v677, %v674
    %v708 = vpack.c.bf16 %v678, %v675
    %v709 = vpack.c.bf16 %v679, %v676
    %v710 = vpack.c.bf16 %v683, %v680
    %v711 = vpack.c.bf16 %v684, %v681
    %v712 = vpack.c.bf16 %v685, %v682
    %v713 = vpack.c.bf16 %v689, %v686
    %v714 = vpack.c.bf16 %v690, %v687
    %v715 = vpack.c.bf16 %v691, %v688
    %v740 = vunpack.c.l.b16 %v692
    %v741 = vunpack.c.l.b16 %v693
    %v742 = vunpack.c.l.b16 %v694
    %v743 = vunpack.c.h.b16 %v692
    %v744 = vunpack.c.h.b16 %v693
    %v745 = vunpack.c.h.b16 %v694
    %v746 = vunpack.c.l.b16 %v695
    %v747 = vunpack.c.l.b16 %v696
    %v748 = vunpack.c.l.b16 %v697
    %v749 = vunpack.c.h.b16 %v695
    %v750 = vunpack.c.h.b16 %v696
    %v751 = vunpack.c.h.b16 %v697
    %v752 = vunpack.c.l.b16 %v698
    %v753 = vunpack.c.l.b16 %v699
    %v754 = vunpack.c.l.b16 %v700
    %v755 = vunpack.c.h.b16 %v698
    %v756 = vunpack.c.h.b16 %v699
    %v757 = vunpack.c.h.b16 %v700
    %v758 = vunpack.c.l.b16 %v701
    %v759 = vunpack.c.l.b16 %v702
    %v760 = vunpack.c.l.b16 %v703
    %v761 = vunpack.c.h.b16 %v701
    %v762 = vunpack.c.h.b16 %v702
    %v763 = vunpack.c.h.b16 %v703
    %v764 = vunpack.c.l.b16 %v704
    %v765 = vunpack.c.l.b16 %v705
    %v766 = vunpack.c.l.b16 %v706
    %v767 = vunpack.c.h.b16 %v704
    %v768 = vunpack.c.h.b16 %v705
    %v769 = vunpack.c.h.b16 %v706
    %v770 = vunpack.c.l.b16 %v707
    %v771 = vunpack.c.l.b16 %v708
    %v772 = vunpack.c.l.b16 %v709
    %v773 = vunpack.c.h.b16 %v707
    %v774 = vunpack.c.h.b16 %v708
    %v775 = vunpack.c.h.b16 %v709
    %v776 = vunpack.c.l.b16 %v710
    %v777 = vunpack.c.l.b16 %v711
    %v778 = vunpack.c.l.b16 %v712
    %v779 = vunpack.c.h.b16 %v710
    %v780 = vunpack.c.h.b16 %v711
    %v781 = vunpack.c.h.b16 %v712
    %v782 = vunpack.c.l.b16 %v713
    %v783 = vunpack.c.l.b16 %v714
    %v784 = vunpack.c.l.b16 %v715
    %v785 = vunpack.c.h.b16 %v713
    %v786 = vunpack.c.h.b16 %v714
    %v787 = vunpack.c.h.b16 %v715
    %v788 = vpack.c.b16 %v741, %v740
    %v789 = vpack.c.b16 %v742, %v742
    %v790 = vpack.c.b16 %v744, %v743
    %v791 = vpack.c.b16 %v745, %v745
    %v792 = vpack.c.b16 %v747, %v746
    %v793 = vpack.c.b16 %v748, %v748
    %v794 = vpack.c.b16 %v750, %v749
    %v795 = vpack.c.b16 %v751, %v751
    %v796 = vpack.c.b16 %v753, %v752
    %v797 = vpack.c.b16 %v754, %v754
    %v798 = vpack.c.b16 %v756, %v755
    %v799 = vpack.c.b16 %v757, %v757
    %v800 = vpack.c.b16 %v759, %v758
    %v801 = vpack.c.b16 %v760, %v760
    %v802 = vpack.c.b16 %v762, %v761
    %v803 = vpack.c.b16 %v763, %v763
    %v804 = vpack.c.b16 %v765, %v764
    %v805 = vpack.c.b16 %v766, %v766
    %v806 = vpack.c.b16 %v768, %v767
    %v807 = vpack.c.b16 %v769, %v769
    %v808 = vpack.c.b16 %v771, %v770
    %v809 = vpack.c.b16 %v772, %v772
    %v810 = vpack.c.b16 %v774, %v773
    %v811 = vpack.c.b16 %v775, %v775
    %v812 = vpack.c.b16 %v777, %v776
    %v813 = vpack.c.b16 %v778, %v778
    %v814 = vpack.c.b16 %v780, %v779
    %v815 = vpack.c.b16 %v781, %v781
    %v816 = vpack.c.b16 %v783, %v782
    %v817 = vpack.c.b16 %v784, %v784
    %v818 = vpack.c.b16 %v786, %v785
    %v819 = vpack.c.b16 %v787, %v787
    %852 = vst [vmem:[#allocation5] sm:$0xff] %v788
    %853 = vst [vmem:[#allocation5 + $0x8] sm:$0xf] %v789
    %854 = vst [vmem:[#allocation5 + $0xc] sm:$0xff] %v790
    %855 = vst [vmem:[#allocation5 + $0x14] sm:$0xf] %v791
    %856 = vst [vmem:[#allocation5 + $0x18] sm:$0xff] %v792
    %857 = vst [vmem:[#allocation5 + $0x20] sm:$0xf] %v793
    %858 = vst [vmem:[#allocation5 + $0x24] sm:$0xff] %v794
    %859 = vst [vmem:[#allocation5 + $0x2c] sm:$0xf] %v795
    %860 = vst [vmem:[#allocation5 + $0x30] sm:$0xff] %v796
    %861 = vst [vmem:[#allocation5 + $0x38] sm:$0xf] %v797
    %862 = vst [vmem:[#allocation5 + $0x3c] sm:$0xff] %v798
    %863 = vst [vmem:[#allocation5 + $0x44] sm:$0xf] %v799
    %864 = vst [vmem:[#allocation5 + $0x48] sm:$0xff] %v800
    %865 = vst [vmem:[#allocation5 + $0x50] sm:$0xf] %v801
    %866 = vst [vmem:[#allocation5 + $0x54] sm:$0xff] %v802
    %867 = vst [vmem:[#allocation5 + $0x5c] sm:$0xf] %v803
    %868 = vst [vmem:[#allocation5 + $0x60] sm:$0xff] %v804
    %869 = vst [vmem:[#allocation5 + $0x68] sm:$0xf] %v805
    %870 = vst [vmem:[#allocation5 + $0x6c] sm:$0xff] %v806
    %871 = vst [vmem:[#allocation5 + $0x74] sm:$0xf] %v807
    %872 = vst [vmem:[#allocation5 + $0x78] sm:$0xff] %v808
    %873 = vst [vmem:[#allocation5 + $0x80] sm:$0xf] %v809
    %874 = vst [vmem:[#allocation5 + $0x84] sm:$0xff] %v810
    %875 = vst [vmem:[#allocation5 + $0x8c] sm:$0xf] %v811
    %876 = vst [vmem:[#allocation5 + $0x90] sm:$0xff] %v812
    %877 = vst [vmem:[#allocation5 + $0x98] sm:$0xf] %v813
    %878 = vst [vmem:[#allocation5 + $0x9c] sm:$0xff] %v814
    %879 = vst [vmem:[#allocation5 + $0xa4] sm:$0xf] %v815
    %880 = vst [vmem:[#allocation5 + $0xa8] sm:$0xff] %v816
    %881 = vst [vmem:[#allocation5 + $0xb0] sm:$0xf] %v817
    %882 = vst [vmem:[#allocation5 + $0xb4] sm:$0xff] %v818
    %883 = vst [vmem:[#allocation5 + $0xbc] sm:$0xf] %v819
    // Predicated region
    $region26: #{tpu_custom_call.1} parent=1 // pred_check
      _
    $region27: #{tpu_custom_call.1} parent=1 // pred_check_branch
      %885 = sbr.rel (0) target = $region29
    $region28: #{tpu_custom_call.1} parent=1 // pred_region
      %s887 = ssub.s32 3072, 3072
      %888 = vsyncadd [#allocation4], %s887
      %s889 = sshll.u32 [#allocation5], 4
      %s890 = int_to_ptr.vmem [resolvable:$true] %s889
      %895 = dma.vmem_to_hbm [thread:$0]  %s890, 3072, %s5, [#allocation4], 192, 192, 12
    $region29: #{tpu_custom_call.1} parent=1 // pred_fallthru
      _
    // Predicated region
    $region30: #{tpu_custom_call.1} parent=1 // pred_check
      _
    $region31: #{tpu_custom_call.1} parent=1 // pred_check_branch
      %897 = sbr.rel (0) target = $region33
    $region32: #{tpu_custom_call.1} parent=1 // pred_region
      %898 = dma.done [#allocation4], 3072
    $region33: #{tpu_custom_call.1} parent=1 // pred_fallthru
      _
    %899 = vsyncpa [#allocation3], 1
    %900 = vsyncpa [#allocation4], 1

</llo_original>
